<compile_context>
chip_gen: v7x
topology: tpu7x:2x2x1
jax: 0.10.0
libtpu: 0.0.40
codegen_flags: <defaults>
</compile_context>

<pallas_src>
import jax
import jax.numpy as jnp
from jax.experimental import pallas as pl
from jax.experimental.pallas import tpu as pltpu

HIDDEN = 512
_MAX_TN = 2048   # output lane-tile cap (multiple of 128)
_MAX_TB = 512    # batch tile cap (multiple of 8)


def _round_up(x, m):
    return (x + m - 1) // m * m


def _choose_out_tiling(out_dim):
    """Pick a lane-dense output tile TN (multiple of 128, <= _MAX_TN) and the
    padded output width out_pad = TN * n_tiles with minimal padding waste."""
    out_128 = _round_up(out_dim, 128)
    n_tiles = -(-out_128 // _MAX_TN)
    tn = _round_up(-(-out_128 // n_tiles), 128)
    return tn, tn * n_tiles


def _decoder_kernel(x_ref, w1_ref, b1_ref, w2_ref, b2_ref, o_ref):
    # Layer 1 (Linear + ReLU). Recomputed every grid step: E is tiny, so this is
    # a few percent of layer-2 FLOPs and hides under the HBM-bound W2 stream; in
    # return both grid axes can be megacore-parallel (v7x).
    h = jnp.dot(x_ref[...], w1_ref[...], preferred_element_type=jnp.float32)
    h = jnp.maximum(h + b1_ref[...], 0.0)              # f32 bias + ReLU epilogue
    # Layer 2: bf16 MXU matmul, f32 accumulation, f32 bias add.
    out = jnp.dot(h.astype(jnp.bfloat16), w2_ref[...],
                  preferred_element_type=jnp.float32)
    o_ref[...] = (out + b2_ref[...]).astype(o_ref.dtype)


def prepare_decoder_params(w1, b1, w2, b2):
    """One-time weight prep (call at model load, NOT per forward pass):
    bf16 cast + pad W2/b2 up to the lane-tiled output width."""
    out_dim = w2.shape[1]
    tn, out_pad = _choose_out_tiling(out_dim)
    w1b = w1.astype(jnp.bfloat16)
    b1f = b1.reshape(1, HIDDEN).astype(jnp.float32)
    w2b = jnp.zeros((HIDDEN, out_pad), jnp.bfloat16).at[:, :out_dim].set(
        w2.astype(jnp.bfloat16))
    b2f = jnp.zeros((1, out_pad), jnp.float32).at[:, :out_dim].set(
        b2.astype(jnp.float32))
    return {"w1": w1b, "b1": b1f, "w2": w2b, "b2": b2f,
            "out_dim": out_dim, "out_pad": out_pad, "tn": tn}


def point_cloud_decoder(x, params, num_points, out_dtype=jnp.float32):
    """x: (B, E) f32; params from prepare_decoder_params.
    Returns (B, num_points, 3) in out_dtype (default f32)."""
    B, E = x.shape
    out_dim, out_pad, TN = params["out_dim"], params["out_pad"], params["tn"]
    assert out_dim == num_points * 3

    TB = min(_MAX_TB, _round_up(B, 8))
    B_pad = _round_up(B, TB)
    grid_b = B_pad // TB
    grid_n = out_pad // TN

    # Per-call input prep (cheap: x is tiny compared to W2).
    xb = x.astype(jnp.bfloat16)
    if B_pad != B:
        xb = jnp.zeros((B_pad, E), jnp.bfloat16).at[:B].set(xb)

    out_bytes = jnp.dtype(out_dtype).itemsize

    # W2/b2 are re-streamed from HBM once per batch tile (index_map (0, j) with i
    # as the outer axis); x/W1/b1 are read once; output written once.
    cost = pl.CostEstimate(
        flops=2 * B_pad * E * HIDDEN * grid_n + 2 * B_pad * HIDDEN * out_pad,
        transcendentals=0,
        bytes_accessed=(xb.size * 2
                        + params["w1"].size * 2 + params["b1"].size * 4
                        + grid_b * (params["w2"].size * 2 + params["b2"].size * 4)
                        + B_pad * out_pad * out_bytes),
    )

    # VMEM budget from actual double-buffered tiles; capped at 48 MiB (v7x-safe).
    vmem_bytes = (2 * TB * E * 2              # x tiles (bf16)
                  + 2 * E * HIDDEN * 2        # w1 (bf16, resident)
                  + 2 * HIDDEN * 4            # b1 (f32)
                  + 2 * HIDDEN * TN * 2       # w2 tiles (bf16)
                  + 2 * TN * 4                # b2 tiles (f32)
                  + 2 * TB * TN * out_bytes)  # output tiles
    vmem_limit = int(min(max(int(1.5 * vmem_bytes), 16 << 20), 48 << 20))

    flat = pl.pallas_call(
        _decoder_kernel,
        out_shape=jax.ShapeDtypeStruct((B_pad, out_pad), out_dtype),
        grid_spec=pltpu.PrefetchScalarGridSpec(
            num_scalar_prefetch=0,
            grid=(grid_b, grid_n),
            in_specs=[
                pl.BlockSpec((TB, E), lambda i, j: (i, 0)),       # x (batch tiles)
                pl.BlockSpec((E, HIDDEN), lambda i, j: (0, 0)),   # w1 (tiny, resident)
                pl.BlockSpec((1, HIDDEN), lambda i, j: (0, 0)),   # b1 (resident)
                pl.BlockSpec((HIDDEN, TN), lambda i, j: (0, j)),  # w2 (streamed over N)
                pl.BlockSpec((1, TN), lambda i, j: (0, j)),       # b2
            ],
            out_specs=pl.BlockSpec((TB, TN), lambda i, j: (i, j)),
        ),
        compiler_params=pltpu.CompilerParams(
            dimension_semantics=("parallel", "parallel"),  # both axes megacore-shardable
            vmem_limit_bytes=vmem_limit,
        ),
        cost_estimate=cost,
    )(xb, params["w1"], params["b1"], params["w2"], params["b2"])

    # Glue: drop padding, then the equivalent of torch's .view(-1, num_points, 3).
    return flat[:B, :out_dim].reshape(B, num_points, 3)


def init_params(key, embedding_dim, num_points, hidden=HIDDEN):
    """Deterministic synthetic parameters with nn.Linear-like shapes.

    PyTorch stores Linear weight as (out, in); we keep (in, out) so the kernel
    computes x @ W directly (mathematically identical)."""
    k1, k2, k3, k4 = jax.random.split(key, 4)
    out_dim = num_points * 3
    w1 = jax.random.normal(k1, (embedding_dim, hidden), jnp.float32) * 0.05
    b1 = jax.random.normal(k2, (hidden,), jnp.float32) * 0.05
    w2 = jax.random.normal(k3, (hidden, out_dim), jnp.float32) * 0.05
    b2 = jax.random.normal(k4, (out_dim,), jnp.float32) * 0.05
    return w1, b1, w2, b2


if __name__ == "__main__":
    # Small shapes consistent with the module's forward pass.
    batch = 8
    embedding_dim = 32
    num_points = 64          # output feature dim = 192 (padded to 256 lanes in-kernel)

    key = jax.random.PRNGKey(0)
    kx, kp = jax.random.split(key)
    x = jax.random.normal(kx, (batch, embedding_dim), jnp.float32)
    w1, b1, w2, b2 = init_params(kp, embedding_dim, num_points)

    params = prepare_decoder_params(w1, b1, w2, b2)   # one-time weight prep
    out = point_cloud_decoder(x, params, num_points)
    out = jax.block_until_ready(out)

    # Reference with matching bf16 weight/activation rounding (f32 accumulate),
    # same math as the PyTorch module.
    xb = x.astype(jnp.bfloat16).astype(jnp.float32)
    w1b = w1.astype(jnp.bfloat16).astype(jnp.float32)
    w2b = w2.astype(jnp.bfloat16).astype(jnp.float32)
    h = jnp.maximum(xb @ w1b + b1, 0.0)
    hb = h.astype(jnp.bfloat16).astype(jnp.float32)
    ref = (hb @ w2b + b2).reshape(-1, num_points, 3)

    assert out.shape == (batch, num_points, 3), out.shape
    assert jnp.allclose(out, ref, atol=1e-2, rtol=1e-2), float(
        jnp.max(jnp.abs(out - ref)))

    print("KERNEL_OK")
</pallas_src>

<mosaic_0001>
module attributes {stable_mosaic.version = 11 : i64} {
  func.func @_decoder_kernel(%arg0: i32, %arg1: i32, %arg2: memref<8x32xbf16, #tpu.memory_space<vmem>>, %arg3: memref<32x512xbf16, #tpu.memory_space<vmem>>, %arg4: memref<1x512xf32, #tpu.memory_space<vmem>>, %arg5: memref<512x256xbf16, #tpu.memory_space<vmem>>, %arg6: memref<1x256xf32, #tpu.memory_space<vmem>>, %arg7: memref<8x256xf32, #tpu.memory_space<vmem>>) attributes {dimension_semantics = [#tpu.dimension_semantics<parallel>, #tpu.dimension_semantics<parallel>], iteration_bounds = array<i64: 1, 1>, scalar_prefetch = 0 : i64, scratch_operands = 0 : i64, tpu.core_type = #tpu.core_type<tc>, window_params = [{transform_indices = @transform_0, window_bounds = array<i64: 8, 32>}, {pipeline_mode = #tpu.pipeline_mode<synchronous>, transform_indices = @transform_1, window_bounds = array<i64: 32, 512>}, {pipeline_mode = #tpu.pipeline_mode<synchronous>, transform_indices = @transform_2, window_bounds = array<i64: 1, 512>}, {transform_indices = @transform_3, window_bounds = array<i64: 512, 256>}, {transform_indices = @transform_4, window_bounds = array<i64: 1, 256>}, {transform_indices = @transform_5, window_bounds = array<i64: 8, 256>}]} {
    %c0 = arith.constant 0 : index
    %c0_0 = arith.constant 0 : index
    %0 = vector.load %arg2[%c0, %c0_0] : memref<8x32xbf16, #tpu.memory_space<vmem>>, vector<8x32xbf16>
    %c0_1 = arith.constant 0 : index
    %c0_2 = arith.constant 0 : index
    %1 = vector.load %arg3[%c0_1, %c0_2] : memref<32x512xbf16, #tpu.memory_space<vmem>>, vector<32x512xbf16>
    %cst = arith.constant dense<0.000000e+00> : vector<8x512xf32>
    %2 = tpu.matmul %0, %1, %cst {dimension_numbers = #tpu.dot_dimension_numbers<[1], [0], [0], [1], [0, 0, 1, 1], [], []>} : vector<8x32xbf16>, vector<32x512xbf16>, vector<8x512xf32> -> vector<8x512xf32>
    %c0_3 = arith.constant 0 : index
    %c0_4 = arith.constant 0 : index
    %3 = vector.load %arg4[%c0_3, %c0_4] : memref<1x512xf32, #tpu.memory_space<vmem>>, vector<1x512xf32>
    %4 = vector.broadcast %3 : vector<1x512xf32> to vector<8x512xf32>
    %5 = arith.addf %2, %4 : vector<8x512xf32>
    %cst_5 = arith.constant 0.000000e+00 : f32
    %6 = vector.broadcast %cst_5 : f32 to vector<8x512xf32>
    %7 = arith.maximumf %5, %6 : vector<8x512xf32>
    %8 = arith.truncf %7 : vector<8x512xf32> to vector<8x512xbf16>
    %c0_6 = arith.constant 0 : index
    %c0_7 = arith.constant 0 : index
    %9 = vector.load %arg5[%c0_6, %c0_7] : memref<512x256xbf16, #tpu.memory_space<vmem>>, vector<512x256xbf16>
    %cst_8 = arith.constant dense<0.000000e+00> : vector<8x256xf32>
    %10 = tpu.matmul %8, %9, %cst_8 {dimension_numbers = #tpu.dot_dimension_numbers<[1], [0], [0], [1], [0, 0, 1, 1], [], []>} : vector<8x512xbf16>, vector<512x256xbf16>, vector<8x256xf32> -> vector<8x256xf32>
    %c0_9 = arith.constant 0 : index
    %c0_10 = arith.constant 0 : index
    %11 = vector.load %arg6[%c0_9, %c0_10] : memref<1x256xf32, #tpu.memory_space<vmem>>, vector<1x256xf32>
    %12 = vector.broadcast %11 : vector<1x256xf32> to vector<8x256xf32>
    %13 = arith.addf %10, %12 : vector<8x256xf32>
    %c0_11 = arith.constant 0 : index
    %c0_12 = arith.constant 0 : index
    %14 = vector.load %arg7[%c0_11, %c0_12] : memref<8x256xf32, #tpu.memory_space<vmem>>, vector<8x256xf32>
    tpu.vector_store %arg7[%c0_11, %c0_12], %13 {strides = array<i32>} : memref<8x256xf32, #tpu.memory_space<vmem>>, vector<8x256xf32>,
    return
  }
  func.func @transform_0(%arg0: i32, %arg1: i32) -> (i32, i32) {
    %c0_i32 = arith.constant 0 : i32
    %c0_i32_0 = arith.constant 0 : i32
    return %arg0, %c0_i32 : i32, i32
  }
  func.func @transform_1(%arg0: i32, %arg1: i32) -> (i32, i32) {
    %c0_i32 = arith.constant 0 : i32
    %c0_i32_0 = arith.constant 0 : i32
    %c0_i32_1 = arith.constant 0 : i32
    return %c0_i32, %c0_i32_0 : i32, i32
  }
  func.func @transform_2(%arg0: i32, %arg1: i32) -> (i32, i32) {
    %c0_i32 = arith.constant 0 : i32
    %c0_i32_0 = arith.constant 0 : i32
    %c0_i32_1 = arith.constant 0 : i32
    return %c0_i32, %c0_i32_0 : i32, i32
  }
  func.func @transform_3(%arg0: i32, %arg1: i32) -> (i32, i32) {
    %c0_i32 = arith.constant 0 : i32
    %c0_i32_0 = arith.constant 0 : i32
    return %c0_i32, %arg1 : i32, i32
  }
  func.func @transform_4(%arg0: i32, %arg1: i32) -> (i32, i32) {
    %c0_i32 = arith.constant 0 : i32
    %c0_i32_0 = arith.constant 0 : i32
    return %c0_i32, %arg1 : i32, i32
  }
  func.func @transform_5(%arg0: i32, %arg1: i32) -> (i32, i32) {
    %c0_i32 = arith.constant 0 : i32
    return %arg0, %arg1 : i32, i32
  }
}

</mosaic_0001>

<llo_original>
// kernel: tpu_custom_call.1
$region0: #{tpu_custom_call.1}
  #allocation0 [shape = 'u32[]', space=smem, size = 0x4, offset = 0x4, fixed_abs, tag = 'smem constant byte address 0x4 - core index']
  #allocation1 [shape = 'u32[144,128]{1,0:T(1,128)}', space=vmem, size = 0x12000, scoped, tag = 'internal scratch']
  %s0 = inlined_call_operand.hbm [shape: bf16[8,32], index: 0, kind: input, shape index: {}]
  %s1 = inlined_call_operand.hbm [shape: bf16[32,512], index: 1, kind: input, shape index: {}]
  %s2 = inlined_call_operand.vmem [shape: f32[1,512], index: 2, kind: input, shape index: {}]
  %s3 = inlined_call_operand.hbm [shape: bf16[512,256], index: 3, kind: input, shape index: {}]
  %s4 = inlined_call_operand.vmem [shape: f32[1,256], index: 4, kind: input, shape index: {}]
  %s5 = inlined_call_operand.hbm [shape: f32[8,256], index: 5, kind: output, shape index: {}]
  %s6 = sld [smem:[#allocation0]]
  $region42: #{tpu_custom_call.1} parent=0
    _
  %s8 = ssub.s32 1, %s6
  %s9 = scalar_select 0, %s8, %s6
  $region1: #{tpu_custom_call.1} parent=0
    #allocation2 [shape = 'u8[2048]{0}', space=vmem, size = 0x800, scoped, tag = 'input window, operand 0, single buffered']
    #allocation3 [shape = 's32[1]{0}', space=sflag, size = 0x4, scoped, tag = 'scoped memory for tpu_custom_call.1']
    #allocation4 [shape = 's32[1]{0}', space=sflag, size = 0x4, scoped, tag = 'scoped memory for tpu_custom_call.1']
    #allocation5 [shape = 'u8[32768]{0}', space=vmem, size = 0x8000, scoped, tag = 'input window, operand 1, single buffered']
    #allocation6 [shape = 's32[1]{0}', space=sflag, size = 0x4, scoped, tag = 'scoped memory for tpu_custom_call.1']
    #allocation7 [shape = 'u8[262144]{0}', space=vmem, size = 0x40000, scoped, tag = 'input window, operand 3, single buffered']
    #allocation8 [shape = 'u8[8192]{0}', space=vmem, size = 0x2000, scoped, tag = 'output window, operand 0, single buffered']
    %10 = vsyncpa [#allocation3], 0
    %11 = vsyncpa [#allocation6], 0
    %12 = vsyncpa [#allocation4], 0
    // Predicated region
    $region2: #{tpu_custom_call.1} parent=1 // pred_check
      _
    $region3: #{tpu_custom_call.1} parent=1 // pred_check_branch
      %14 = sbr.rel (0) target = $region5
    $region4: #{tpu_custom_call.1} parent=1 // pred_region
      %s16 = ssub.s32 64, 64
      %17 = vsyncadd [#allocation3], %s16
      %s19 = sshll.u32 [#allocation2], 4
      %s20 = int_to_ptr.vmem [resolvable:$true] %s19
      %22 = dma.hbm_to_vmem [thread:$0]  %s0, 64, %s20, [#allocation3]
    $region5: #{tpu_custom_call.1} parent=1 // pred_fallthru
      _
    // Predicated region
    $region6: #{tpu_custom_call.1} parent=1 // pred_check
      _
    $region7: #{tpu_custom_call.1} parent=1 // pred_check_branch
      %24 = sbr.rel (0) target = $region9
    $region8: #{tpu_custom_call.1} parent=1 // pred_region
      %s26 = ssub.s32 1024, 1024
      %27 = vsyncadd [#allocation6], %s26
      %s28 = sshll.u32 [#allocation5], 4
      %s29 = int_to_ptr.vmem [resolvable:$true] %s28
      %34 = dma.hbm_to_vmem [thread:$0]  %s1, 1024, %s29, [#allocation6], 256, 256, 16
    $region9: #{tpu_custom_call.1} parent=1 // pred_fallthru
      _
    // Predicated region
    $region10: #{tpu_custom_call.1} parent=1 // pred_check
      _
    $region11: #{tpu_custom_call.1} parent=1 // pred_check_branch
      %36 = sbr.rel (0) target = $region13
    $region12: #{tpu_custom_call.1} parent=1 // pred_region
      _
    $region13: #{tpu_custom_call.1} parent=1 // pred_fallthru
      _
    // Predicated region
    $region14: #{tpu_custom_call.1} parent=1 // pred_check
      _
    $region15: #{tpu_custom_call.1} parent=1 // pred_check_branch
      %38 = sbr.rel (0) target = $region17
    $region16: #{tpu_custom_call.1} parent=1 // pred_region
      %s40 = ssub.s32 8192, 8192
      %41 = vsyncadd [#allocation6], %s40
      %s42 = sshll.u32 [#allocation7], 4
      %s43 = int_to_ptr.vmem [resolvable:$true] %s42
      %48 = dma.hbm_to_vmem [thread:$0]  %s3, 8192, %s43, [#allocation6], 128, 128, 8
    $region17: #{tpu_custom_call.1} parent=1 // pred_fallthru
      _
    // Predicated region
    $region18: #{tpu_custom_call.1} parent=1 // pred_check
      _
    $region19: #{tpu_custom_call.1} parent=1 // pred_check_branch
      %50 = sbr.rel (0) target = $region21
    $region20: #{tpu_custom_call.1} parent=1 // pred_region
      _
    $region21: #{tpu_custom_call.1} parent=1 // pred_fallthru
      _
    // Predicated region
    $region22: #{tpu_custom_call.1} parent=1 // pred_check
      _
    $region23: #{tpu_custom_call.1} parent=1 // pred_check_branch
      %52 = sbr.rel (0) target = $region25
    $region24: #{tpu_custom_call.1} parent=1 // pred_region
      %53 = dma.done [#allocation3], 64
    $region25: #{tpu_custom_call.1} parent=1 // pred_fallthru
      _
    // Predicated region
    $region26: #{tpu_custom_call.1} parent=1 // pred_check
      _
    $region27: #{tpu_custom_call.1} parent=1 // pred_check_branch
      %55 = sbr.rel (0) target = $region29
    $region28: #{tpu_custom_call.1} parent=1 // pred_region
      %56 = dma.done [#allocation6], 1024
    $region29: #{tpu_custom_call.1} parent=1 // pred_fallthru
      _
    // Predicated region
    $region30: #{tpu_custom_call.1} parent=1 // pred_check
      _
    $region31: #{tpu_custom_call.1} parent=1 // pred_check_branch
      %58 = sbr.rel (0) target = $region33
    $region32: #{tpu_custom_call.1} parent=1 // pred_region
      %59 = dma.done [#allocation6], 8192
    $region33: #{tpu_custom_call.1} parent=1 // pred_fallthru
      _
    %v61 = vld [vmem:[#allocation2] sm:$0xf]
    %v62 = vld [vmem:[#allocation5] sm:$0xff]
    %v63 = vld [vmem:[#allocation5 + $0x8] sm:$0xff]
    %v64 = vld [vmem:[#allocation5 + $0x10] sm:$0xff]
    %v65 = vld [vmem:[#allocation5 + $0x18] sm:$0xff]
    %v66 = vld [vmem:[#allocation5 + $0x20] sm:$0xff]
    %v67 = vld [vmem:[#allocation5 + $0x28] sm:$0xff]
    %v68 = vld [vmem:[#allocation5 + $0x30] sm:$0xff]
    %v69 = vld [vmem:[#allocation5 + $0x38] sm:$0xff]
    %v70 = vld [vmem:[%s2] sm:$0xf]
    %v72 = vlaneseq
    %v73 = vshrl.u32 %v72, 7
    %v74 = vsub.s32 0, %v73
    %v75 = vrot.slane %v70, %v74
    %v76 = vlaneseq
    %v77 = vshrl.u32 %v76, 7
    %v78 = vsub.s32 1, %v77
    %v79 = vrot.slane %v70, %v78
    %v80 = vlaneseq
    %v81 = vshrl.u32 %v80, 7
    %v82 = vsub.s32 2, %v81
    %v83 = vrot.slane %v70, %v82
    %v84 = vlaneseq
    %v85 = vshrl.u32 %v84, 7
    %v86 = vsub.s32 3, %v85
    %v87 = vrot.slane %v70, %v86
    %v100 = vunpack.c.l.b16 %v62
    %v101 = vunpack.c.h.b16 %v62
    %v102 = vunpack.c.l.b16 %v63
    %v103 = vunpack.c.h.b16 %v63
    %v104 = vunpack.c.l.b16 %v64
    %v105 = vunpack.c.h.b16 %v64
    %v106 = vunpack.c.l.b16 %v65
    %v107 = vunpack.c.h.b16 %v65
    %v108 = vunpack.c.l.b16 %v66
    %v109 = vunpack.c.h.b16 %v66
    %v110 = vunpack.c.l.b16 %v67
    %v111 = vunpack.c.h.b16 %v67
    %v112 = vunpack.c.l.b16 %v68
    %v113 = vunpack.c.h.b16 %v68
    %v114 = vunpack.c.l.b16 %v69
    %v115 = vunpack.c.h.b16 %v69
    %v116 = vpack.c.b16 %v104, %v100
    %v117 = vpack.c.b16 %v105, %v101
    %v118 = vpack.c.b16 %v106, %v102
    %v119 = vpack.c.b16 %v107, %v103
    %v120 = vpack.c.b16 %v112, %v108
    %v121 = vpack.c.b16 %v113, %v109
    %v122 = vpack.c.b16 %v114, %v110
    %v123 = vpack.c.b16 %v115, %v111
    %vm132 = vcmask 261120
    %v134 = vsel %vm132, %v61, 0
    %136 = vmatprep.subr.bf16.mxu0 %v117
    %137 = vmatpush1.bf16.msra.mxu0 %v116
    %138 = vmatprep.subr.bf16.mxu0 %v121
    %139 = vmatpush1.bf16.msra.mxu0 %v120
    %140 = vmatprep.subr.bf16.mxu0 0
    %141 = vmatpush1.bf16.msra.mxu0 0
    %142 = vmatprep.subr.bf16.mxu0 0
    %143 = vmatpush1.bf16.msra.mxu0 0
    %144 = vmatprep.subr.bf16.mxu0 0
    %145 = vmatpush1.bf16.msra.mxu0 0
    %146 = vmatprep.subr.bf16.mxu0 0
    %147 = vmatpush1.bf16.msra.mxu0 0
    %148 = vmatprep.subr.bf16.mxu0 0
    %149 = vmatpush1.bf16.msra.mxu0 0
    %150 = vmatprep.subr.bf16.mxu0 0
    %151 = vmatpush1.bf16.msra.mxu0 0
    %152 = vmatprep.subr.bf16.mxu0 0
    %153 = vmatpush1.bf16.msra.mxu0 0
    %154 = vmatprep.subr.bf16.mxu0 0
    %155 = vmatpush1.bf16.msra.mxu0 0
    %156 = vmatprep.subr.bf16.mxu0 0
    %157 = vmatpush1.bf16.msra.mxu0 0
    %158 = vmatprep.subr.bf16.mxu0 0
    %159 = vmatpush1.bf16.msra.mxu0 0
    %160 = vmatprep.subr.bf16.mxu0 0
    %161 = vmatpush1.bf16.msra.mxu0 0
    %162 = vmatprep.subr.bf16.mxu0 0
    %163 = vmatpush1.bf16.msra.mxu0 0
    %164 = vmatprep.subr.bf16.mxu0 0
    %165 = vmatpush1.bf16.msra.mxu0 0
    %166 = vmatprep.subr.bf16.mxu0 0
    %167 = vmatpush1.bf16.msra.mxu0 0
    %168 = vmatprep.mubr.bf16.mxu0 0
    %169 = vmatmul.mubr.bf16.gmra.mrb[0].mxu0 %v134
    %v170 = vpop.f32.mrb[0].mxu0
    %v171 = vadd.f32 %v75, %v170
    %v172 = vpop.f32.mrb[0].mxu0
    %v173 = vadd.f32 %v79, %v172
    %v174 = vpop.f32.mrb[0].mxu0
    %v175 = vpop.f32.mrb[0].mxu0
    %176 = vdwg.mxu0
    %177 = vmatprep.subr.bf16.mxu0 %v119
    %178 = vmatpush1.bf16.msra.mxu0 %v118
    %179 = vmatprep.subr.bf16.mxu0 %v123
    %180 = vmatpush1.bf16.msra.mxu0 %v122
    %181 = vmatprep.subr.bf16.mxu0 0
    %182 = vmatpush1.bf16.msra.mxu0 0
    %183 = vmatprep.subr.bf16.mxu0 0
    %184 = vmatpush1.bf16.msra.mxu0 0
    %185 = vmatprep.subr.bf16.mxu0 0
    %186 = vmatpush1.bf16.msra.mxu0 0
    %187 = vmatprep.subr.bf16.mxu0 0
    %188 = vmatpush1.bf16.msra.mxu0 0
    %189 = vmatprep.subr.bf16.mxu0 0
    %190 = vmatpush1.bf16.msra.mxu0 0
    %191 = vmatprep.subr.bf16.mxu0 0
    %192 = vmatpush1.bf16.msra.mxu0 0
    %193 = vmatprep.subr.bf16.mxu0 0
    %194 = vmatpush1.bf16.msra.mxu0 0
    %195 = vmatprep.subr.bf16.mxu0 0
    %196 = vmatpush1.bf16.msra.mxu0 0
    %197 = vmatprep.subr.bf16.mxu0 0
    %198 = vmatpush1.bf16.msra.mxu0 0
    %199 = vmatprep.subr.bf16.mxu0 0
    %200 = vmatpush1.bf16.msra.mxu0 0
    %201 = vmatprep.subr.bf16.mxu0 0
    %202 = vmatpush1.bf16.msra.mxu0 0
    %203 = vmatprep.subr.bf16.mxu0 0
    %204 = vmatpush1.bf16.msra.mxu0 0
    %205 = vmatprep.subr.bf16.mxu0 0
    %206 = vmatpush1.bf16.msra.mxu0 0
    %207 = vmatprep.subr.bf16.mxu0 0
    %208 = vmatpush1.bf16.msra.mxu0 0
    %209 = vmatprep.mubr.bf16.mxu0 0
    %210 = vmatmul.mubr.bf16.gmra.mrb[0].mxu0 %v134
    %v211 = vpop.f32.mrb[0].mxu0
    %v212 = vadd.f32 %v83, %v211
    %v213 = vpop.f32.mrb[0].mxu0
    %v214 = vadd.f32 %v87, %v213
    %v215 = vpop.f32.mrb[0].mxu0
    %v216 = vpop.f32.mrb[0].mxu0
    %217 = vdwg.mxu0
    %v218 = vmax.f32 %v171, 0.0
    %v219 = vmax.f32 %v173, 0.0
    %v220 = vmax.f32 %v212, 0.0
    %v221 = vmax.f32 %v214, 0.0
    %v222 = vpack.c.bf16 %v218, %v218
    %v223 = vpack.c.bf16 %v219, %v219
    %v224 = vpack.c.bf16 %v220, %v220
    %v225 = vpack.c.bf16 %v221, %v221
    %v226 = vld [vmem:[#allocation7] sm:$0xff]
    %v227 = vld [vmem:[#allocation7 + $0x8] sm:$0xff]
    %v228 = vld [vmem:[#allocation7 + $0x10] sm:$0xff]
    %v229 = vld [vmem:[#allocation7 + $0x18] sm:$0xff]
    %v230 = vld [vmem:[#allocation7 + $0x20] sm:$0xff]
    %v231 = vld [vmem:[#allocation7 + $0x28] sm:$0xff]
    %v232 = vld [vmem:[#allocation7 + $0x30] sm:$0xff]
    %v233 = vld [vmem:[#allocation7 + $0x38] sm:$0xff]
    %v234 = vld [vmem:[#allocation7 + $0x40] sm:$0xff]
    %v235 = vld [vmem:[#allocation7 + $0x48] sm:$0xff]
    %v236 = vld [vmem:[#allocation7 + $0x50] sm:$0xff]
    %v237 = vld [vmem:[#allocation7 + $0x58] sm:$0xff]
    %v238 = vld [vmem:[#allocation7 + $0x60] sm:$0xff]
    %v239 = vld [vmem:[#allocation7 + $0x68] sm:$0xff]
    %v240 = vld [vmem:[#allocation7 + $0x70] sm:$0xff]
    %v241 = vld [vmem:[#allocation7 + $0x78] sm:$0xff]
    %v242 = vld [vmem:[#allocation7 + $0x80] sm:$0xff]
    %v243 = vld [vmem:[#allocation7 + $0x88] sm:$0xff]
    %v244 = vld [vmem:[#allocation7 + $0x90] sm:$0xff]
    %v245 = vld [vmem:[#allocation7 + $0x98] sm:$0xff]
    %v246 = vld [vmem:[#allocation7 + $0xa0] sm:$0xff]
    %v247 = vld [vmem:[#allocation7 + $0xa8] sm:$0xff]
    %v248 = vld [vmem:[#allocation7 + $0xb0] sm:$0xff]
    %v249 = vld [vmem:[#allocation7 + $0xb8] sm:$0xff]
    %v250 = vld [vmem:[#allocation7 + $0xc0] sm:$0xff]
    %v251 = vld [vmem:[#allocation7 + $0xc8] sm:$0xff]
    %v252 = vld [vmem:[#allocation7 + $0xd0] sm:$0xff]
    %v253 = vld [vmem:[#allocation7 + $0xd8] sm:$0xff]
    %v254 = vld [vmem:[#allocation7 + $0xe0] sm:$0xff]
    %v255 = vld [vmem:[#allocation7 + $0xe8] sm:$0xff]
    %v256 = vld [vmem:[#allocation7 + $0xf0] sm:$0xff]
    %v257 = vld [vmem:[#allocation7 + $0xf8] sm:$0xff]
    %v258 = vld [vmem:[#allocation7 + $0x100] sm:$0xff]
    %v259 = vld [vmem:[#allocation7 + $0x108] sm:$0xff]
    %v260 = vld [vmem:[#allocation7 + $0x110] sm:$0xff]
    %v261 = vld [vmem:[#allocation7 + $0x118] sm:$0xff]
    %v262 = vld [vmem:[#allocation7 + $0x120] sm:$0xff]
    %v263 = vld [vmem:[#allocation7 + $0x128] sm:$0xff]
    %v264 = vld [vmem:[#allocation7 + $0x130] sm:$0xff]
    %v265 = vld [vmem:[#allocation7 + $0x138] sm:$0xff]
    %v266 = vld [vmem:[#allocation7 + $0x140] sm:$0xff]
    %v267 = vld [vmem:[#allocation7 + $0x148] sm:$0xff]
    %v268 = vld [vmem:[#allocation7 + $0x150] sm:$0xff]
    %v269 = vld [vmem:[#allocation7 + $0x158] sm:$0xff]
    %v270 = vld [vmem:[#allocation7 + $0x160] sm:$0xff]
    %v271 = vld [vmem:[#allocation7 + $0x168] sm:$0xff]
    %v272 = vld [vmem:[#allocation7 + $0x170] sm:$0xff]
    %v273 = vld [vmem:[#allocation7 + $0x178] sm:$0xff]
    %v274 = vld [vmem:[#allocation7 + $0x180] sm:$0xff]
    %v275 = vld [vmem:[#allocation7 + $0x188] sm:$0xff]
    %v276 = vld [vmem:[#allocation7 + $0x190] sm:$0xff]
    %v277 = vld [vmem:[#allocation7 + $0x198] sm:$0xff]
    %v278 = vld [vmem:[#allocation7 + $0x1a0] sm:$0xff]
    %v279 = vld [vmem:[#allocation7 + $0x1a8] sm:$0xff]
    %v280 = vld [vmem:[#allocation7 + $0x1b0] sm:$0xff]
    %v281 = vld [vmem:[#allocation7 + $0x1b8] sm:$0xff]
    %v282 = vld [vmem:[#allocation7 + $0x1c0] sm:$0xff]
    %v283 = vld [vmem:[#allocation7 + $0x1c8] sm:$0xff]
    %v284 = vld [vmem:[#allocation7 + $0x1d0] sm:$0xff]
    %v285 = vld [vmem:[#allocation7 + $0x1d8] sm:$0xff]
    %v286 = vld [vmem:[#allocation7 + $0x1e0] sm:$0xff]
    %v287 = vld [vmem:[#allocation7 + $0x1e8] sm:$0xff]
    %v288 = vld [vmem:[#allocation7 + $0x1f0] sm:$0xff]
    %v289 = vld [vmem:[#allocation7 + $0x1f8] sm:$0xff]
    %v290 = vld [vmem:[%s4] sm:$0x3]
    %v292 = vlaneseq
    %v293 = vshrl.u32 %v292, 7
    %v294 = vsub.s32 0, %v293
    %v295 = vrot.slane %v290, %v294
    %v296 = vlaneseq
    %v297 = vshrl.u32 %v296, 7
    %v298 = vsub.s32 1, %v297
    %v299 = vrot.slane %v290, %v298
    %v366 = vunpack.c.l.b16 %v226
    %v367 = vunpack.c.h.b16 %v226
    %v368 = vunpack.c.l.b16 %v227
    %v369 = vunpack.c.h.b16 %v227
    %v370 = vunpack.c.l.b16 %v228
    %v371 = vunpack.c.h.b16 %v228
    %v372 = vunpack.c.l.b16 %v229
    %v373 = vunpack.c.h.b16 %v229
    %v374 = vunpack.c.l.b16 %v230
    %v375 = vunpack.c.h.b16 %v230
    %v376 = vunpack.c.l.b16 %v231
    %v377 = vunpack.c.h.b16 %v231
    %v378 = vunpack.c.l.b16 %v232
    %v379 = vunpack.c.h.b16 %v232
    %v380 = vunpack.c.l.b16 %v233
    %v381 = vunpack.c.h.b16 %v233
    %v382 = vunpack.c.l.b16 %v234
    %v383 = vunpack.c.h.b16 %v234
    %v384 = vunpack.c.l.b16 %v235
    %v385 = vunpack.c.h.b16 %v235
    %v386 = vunpack.c.l.b16 %v236
    %v387 = vunpack.c.h.b16 %v236
    %v388 = vunpack.c.l.b16 %v237
    %v389 = vunpack.c.h.b16 %v237
    %v390 = vunpack.c.l.b16 %v238
    %v391 = vunpack.c.h.b16 %v238
    %v392 = vunpack.c.l.b16 %v239
    %v393 = vunpack.c.h.b16 %v239
    %v394 = vunpack.c.l.b16 %v240
    %v395 = vunpack.c.h.b16 %v240
    %v396 = vunpack.c.l.b16 %v241
    %v397 = vunpack.c.h.b16 %v241
    %v398 = vunpack.c.l.b16 %v242
    %v399 = vunpack.c.h.b16 %v242
    %v400 = vunpack.c.l.b16 %v243
    %v401 = vunpack.c.h.b16 %v243
    %v402 = vunpack.c.l.b16 %v244
    %v403 = vunpack.c.h.b16 %v244
    %v404 = vunpack.c.l.b16 %v245
    %v405 = vunpack.c.h.b16 %v245
    %v406 = vunpack.c.l.b16 %v246
    %v407 = vunpack.c.h.b16 %v246
    %v408 = vunpack.c.l.b16 %v247
    %v409 = vunpack.c.h.b16 %v247
    %v410 = vunpack.c.l.b16 %v248
    %v411 = vunpack.c.h.b16 %v248
    %v412 = vunpack.c.l.b16 %v249
    %v413 = vunpack.c.h.b16 %v249
    %v414 = vunpack.c.l.b16 %v250
    %v415 = vunpack.c.h.b16 %v250
    %v416 = vunpack.c.l.b16 %v251
    %v417 = vunpack.c.h.b16 %v251
    %v418 = vunpack.c.l.b16 %v252
    %v419 = vunpack.c.h.b16 %v252
    %v420 = vunpack.c.l.b16 %v253
    %v421 = vunpack.c.h.b16 %v253
    %v422 = vunpack.c.l.b16 %v254
    %v423 = vunpack.c.h.b16 %v254
    %v424 = vunpack.c.l.b16 %v255
    %v425 = vunpack.c.h.b16 %v255
    %v426 = vunpack.c.l.b16 %v256
    %v427 = vunpack.c.h.b16 %v256
    %v428 = vunpack.c.l.b16 %v257
    %v429 = vunpack.c.h.b16 %v257
    %v430 = vunpack.c.l.b16 %v258
    %v431 = vunpack.c.h.b16 %v258
    %v432 = vunpack.c.l.b16 %v259
    %v433 = vunpack.c.h.b16 %v259
    %v434 = vunpack.c.l.b16 %v260
    %v435 = vunpack.c.h.b16 %v260
    %v436 = vunpack.c.l.b16 %v261
    %v437 = vunpack.c.h.b16 %v261
    %v438 = vunpack.c.l.b16 %v262
    %v439 = vunpack.c.h.b16 %v262
    %v440 = vunpack.c.l.b16 %v263
    %v441 = vunpack.c.h.b16 %v263
    %v442 = vunpack.c.l.b16 %v264
    %v443 = vunpack.c.h.b16 %v264
    %v444 = vunpack.c.l.b16 %v265
    %v445 = vunpack.c.h.b16 %v265
    %v446 = vunpack.c.l.b16 %v266
    %v447 = vunpack.c.h.b16 %v266
    %v448 = vunpack.c.l.b16 %v267
    %v449 = vunpack.c.h.b16 %v267
    %v450 = vunpack.c.l.b16 %v268
    %v451 = vunpack.c.h.b16 %v268
    %v452 = vunpack.c.l.b16 %v269
    %v453 = vunpack.c.h.b16 %v269
    %v454 = vunpack.c.l.b16 %v270
    %v455 = vunpack.c.h.b16 %v270
    %v456 = vunpack.c.l.b16 %v271
    %v457 = vunpack.c.h.b16 %v271
    %v458 = vunpack.c.l.b16 %v272
    %v459 = vunpack.c.h.b16 %v272
    %v460 = vunpack.c.l.b16 %v273
    %v461 = vunpack.c.h.b16 %v273
    %v462 = vunpack.c.l.b16 %v274
    %v463 = vunpack.c.h.b16 %v274
    %v464 = vunpack.c.l.b16 %v275
    %v465 = vunpack.c.h.b16 %v275
    %v466 = vunpack.c.l.b16 %v276
    %v467 = vunpack.c.h.b16 %v276
    %v468 = vunpack.c.l.b16 %v277
    %v469 = vunpack.c.h.b16 %v277
    %v470 = vunpack.c.l.b16 %v278
    %v471 = vunpack.c.h.b16 %v278
    %v472 = vunpack.c.l.b16 %v279
    %v473 = vunpack.c.h.b16 %v279
    %v474 = vunpack.c.l.b16 %v280
    %v475 = vunpack.c.h.b16 %v280
    %v476 = vunpack.c.l.b16 %v281
    %v477 = vunpack.c.h.b16 %v281
    %v478 = vunpack.c.l.b16 %v282
    %v479 = vunpack.c.h.b16 %v282
    %v480 = vunpack.c.l.b16 %v283
    %v481 = vunpack.c.h.b16 %v283
    %v482 = vunpack.c.l.b16 %v284
    %v483 = vunpack.c.h.b16 %v284
    %v484 = vunpack.c.l.b16 %v285
    %v485 = vunpack.c.h.b16 %v285
    %v486 = vunpack.c.l.b16 %v286
    %v487 = vunpack.c.h.b16 %v286
    %v488 = vunpack.c.l.b16 %v287
    %v489 = vunpack.c.h.b16 %v287
    %v490 = vunpack.c.l.b16 %v288
    %v491 = vunpack.c.h.b16 %v288
    %v492 = vunpack.c.l.b16 %v289
    %v493 = vunpack.c.h.b16 %v289
    %v494 = vpack.c.b16 %v368, %v366
    %v495 = vpack.c.b16 %v369, %v367
    %v496 = vpack.c.b16 %v372, %v370
    %v497 = vpack.c.b16 %v373, %v371
    %v498 = vpack.c.b16 %v376, %v374
    %v499 = vpack.c.b16 %v377, %v375
    %v500 = vpack.c.b16 %v380, %v378
    %v501 = vpack.c.b16 %v381, %v379
    %v502 = vpack.c.b16 %v384, %v382
    %v503 = vpack.c.b16 %v385, %v383
    %v504 = vpack.c.b16 %v388, %v386
    %v505 = vpack.c.b16 %v389, %v387
    %v506 = vpack.c.b16 %v392, %v390
    %v507 = vpack.c.b16 %v393, %v391
    %v508 = vpack.c.b16 %v396, %v394
    %v509 = vpack.c.b16 %v397, %v395
    %v510 = vpack.c.b16 %v400, %v398
    %v511 = vpack.c.b16 %v401, %v399
    %v512 = vpack.c.b16 %v404, %v402
    %v513 = vpack.c.b16 %v405, %v403
    %v514 = vpack.c.b16 %v408, %v406
    %v515 = vpack.c.b16 %v409, %v407
    %v516 = vpack.c.b16 %v412, %v410
    %v517 = vpack.c.b16 %v413, %v411
    %v518 = vpack.c.b16 %v416, %v414
    %v519 = vpack.c.b16 %v417, %v415
    %v520 = vpack.c.b16 %v420, %v418
    %v521 = vpack.c.b16 %v421, %v419
    %v522 = vpack.c.b16 %v424, %v422
    %v523 = vpack.c.b16 %v425, %v423
    %v524 = vpack.c.b16 %v428, %v426
    %v525 = vpack.c.b16 %v429, %v427
    %v526 = vpack.c.b16 %v432, %v430
    %v527 = vpack.c.b16 %v433, %v431
    %v528 = vpack.c.b16 %v436, %v434
    %v529 = vpack.c.b16 %v437, %v435
    %v530 = vpack.c.b16 %v440, %v438
    %v531 = vpack.c.b16 %v441, %v439
    %v532 = vpack.c.b16 %v444, %v442
    %v533 = vpack.c.b16 %v445, %v443
    %v534 = vpack.c.b16 %v448, %v446
    %v535 = vpack.c.b16 %v449, %v447
    %v536 = vpack.c.b16 %v452, %v450
    %v537 = vpack.c.b16 %v453, %v451
    %v538 = vpack.c.b16 %v456, %v454
    %v539 = vpack.c.b16 %v457, %v455
    %v540 = vpack.c.b16 %v460, %v458
    %v541 = vpack.c.b16 %v461, %v459
    %v542 = vpack.c.b16 %v464, %v462
    %v543 = vpack.c.b16 %v465, %v463
    %v544 = vpack.c.b16 %v468, %v466
    %v545 = vpack.c.b16 %v469, %v467
    %v546 = vpack.c.b16 %v472, %v470
    %v547 = vpack.c.b16 %v473, %v471
    %v548 = vpack.c.b16 %v476, %v474
    %v549 = vpack.c.b16 %v477, %v475
    %v550 = vpack.c.b16 %v480, %v478
    %v551 = vpack.c.b16 %v481, %v479
    %v552 = vpack.c.b16 %v484, %v482
    %v553 = vpack.c.b16 %v485, %v483
    %v554 = vpack.c.b16 %v488, %v486
    %v555 = vpack.c.b16 %v489, %v487
    %v556 = vpack.c.b16 %v492, %v490
    %v557 = vpack.c.b16 %v493, %v491
    %622 = vmatprep.subr.bf16.mxu0 %v495
    %623 = vmatpush1.bf16.msra.mxu0 %v494
    %624 = vmatprep.subr.bf16.mxu0 %v497
    %625 = vmatpush1.bf16.msra.mxu0 %v496
    %626 = vmatprep.subr.bf16.mxu0 %v499
    %627 = vmatpush1.bf16.msra.mxu0 %v498
    %628 = vmatprep.subr.bf16.mxu0 %v501
    %629 = vmatpush1.bf16.msra.mxu0 %v500
    %630 = vmatprep.subr.bf16.mxu0 %v503
    %631 = vmatpush1.bf16.msra.mxu0 %v502
    %632 = vmatprep.subr.bf16.mxu0 %v505
    %633 = vmatpush1.bf16.msra.mxu0 %v504
    %634 = vmatprep.subr.bf16.mxu0 %v507
    %635 = vmatpush1.bf16.msra.mxu0 %v506
    %636 = vmatprep.subr.bf16.mxu0 %v509
    %637 = vmatpush1.bf16.msra.mxu0 %v508
    %638 = vmatprep.subr.bf16.mxu0 %v511
    %639 = vmatpush1.bf16.msra.mxu0 %v510
    %640 = vmatprep.subr.bf16.mxu0 %v513
    %641 = vmatpush1.bf16.msra.mxu0 %v512
    %642 = vmatprep.subr.bf16.mxu0 %v515
    %643 = vmatpush1.bf16.msra.mxu0 %v514
    %644 = vmatprep.subr.bf16.mxu0 %v517
    %645 = vmatpush1.bf16.msra.mxu0 %v516
    %646 = vmatprep.subr.bf16.mxu0 %v519
    %647 = vmatpush1.bf16.msra.mxu0 %v518
    %648 = vmatprep.subr.bf16.mxu0 %v521
    %649 = vmatpush1.bf16.msra.mxu0 %v520
    %650 = vmatprep.subr.bf16.mxu0 %v523
    %651 = vmatpush1.bf16.msra.mxu0 %v522
    %652 = vmatprep.subr.bf16.mxu0 %v525
    %653 = vmatpush1.bf16.msra.mxu0 %v524
    %654 = vmatprep.mubr.bf16.mxu0 %v223
    %655 = vmatmul.mubr.bf16.gmra.mrb[0].mxu0 %v222
    %v656 = vpop.f32.mrb[0].mxu0
    %v657 = vadd.f32 %v295, %v656
    %v658 = vpop.f32.mrb[0].mxu0
    %v659 = vadd.f32 %v299, %v658
    %v660 = vpop.f32.mrb[0].mxu0
    %v661 = vpop.f32.mrb[0].mxu0
    %662 = vdwg.mxu0
    %663 = vmatprep.subr.bf16.mxu0 %v527
    %664 = vmatpush1.bf16.msra.mxu0 %v526
    %665 = vmatprep.subr.bf16.mxu0 %v529
    %666 = vmatpush1.bf16.msra.mxu0 %v528
    %667 = vmatprep.subr.bf16.mxu0 %v531
    %668 = vmatpush1.bf16.msra.mxu0 %v530
    %669 = vmatprep.subr.bf16.mxu0 %v533
    %670 = vmatpush1.bf16.msra.mxu0 %v532
    %671 = vmatprep.subr.bf16.mxu0 %v535
    %672 = vmatpush1.bf16.msra.mxu0 %v534
    %673 = vmatprep.subr.bf16.mxu0 %v537
    %674 = vmatpush1.bf16.msra.mxu0 %v536
    %675 = vmatprep.subr.bf16.mxu0 %v539
    %676 = vmatpush1.bf16.msra.mxu0 %v538
    %677 = vmatprep.subr.bf16.mxu0 %v541
    %678 = vmatpush1.bf16.msra.mxu0 %v540
    %679 = vmatprep.subr.bf16.mxu0 %v543
    %680 = vmatpush1.bf16.msra.mxu0 %v542
    %681 = vmatprep.subr.bf16.mxu0 %v545
    %682 = vmatpush1.bf16.msra.mxu0 %v544
    %683 = vmatprep.subr.bf16.mxu0 %v547
    %684 = vmatpush1.bf16.msra.mxu0 %v546
    %685 = vmatprep.subr.bf16.mxu0 %v549
    %686 = vmatpush1.bf16.msra.mxu0 %v548
    %687 = vmatprep.subr.bf16.mxu0 %v551
    %688 = vmatpush1.bf16.msra.mxu0 %v550
    %689 = vmatprep.subr.bf16.mxu0 %v553
    %690 = vmatpush1.bf16.msra.mxu0 %v552
    %691 = vmatprep.subr.bf16.mxu0 %v555
    %692 = vmatpush1.bf16.msra.mxu0 %v554
    %693 = vmatprep.subr.bf16.mxu0 %v557
    %694 = vmatpush1.bf16.msra.mxu0 %v556
    %695 = vmatprep.mubr.bf16.mxu0 %v225
    %696 = vmatmul.mubr.bf16.gmra.mrb[0].mxu0 %v224
    %v697 = vpop.f32.mrb[0].mxu0
    %v698 = vadd.f32 %v657, %v697
    %v699 = vpop.f32.mrb[0].mxu0
    %v700 = vadd.f32 %v659, %v699
    %v701 = vpop.f32.mrb[0].mxu0
    %v702 = vpop.f32.mrb[0].mxu0
    %703 = vdwg.mxu0
    %704 = vst [vmem:[#allocation8] sm:$0xff] %v698
    %705 = vst [vmem:[#allocation8 + $0x8] sm:$0xff] %v700
    // Predicated region
    $region34: #{tpu_custom_call.1} parent=1 // pred_check
      _
    $region35: #{tpu_custom_call.1} parent=1 // pred_check_branch
      %707 = sbr.rel (0) target = $region37
    $region36: #{tpu_custom_call.1} parent=1 // pred_region
      %s709 = ssub.s32 256, 256
      %710 = vsyncadd [#allocation4], %s709
      %s712 = sshll.u32 [#allocation8], 4
      %s713 = int_to_ptr.vmem [resolvable:$true] %s712
      %715 = dma.vmem_to_hbm [thread:$0]  %s713, 256, %s5, [#allocation4]
    $region37: #{tpu_custom_call.1} parent=1 // pred_fallthru
      _
    // Predicated region
    $region38: #{tpu_custom_call.1} parent=1 // pred_check
      _
    $region39: #{tpu_custom_call.1} parent=1 // pred_check_branch
      %717 = sbr.rel (0) target = $region41
    $region40: #{tpu_custom_call.1} parent=1 // pred_region
      %718 = dma.done [#allocation4], 256
    $region41: #{tpu_custom_call.1} parent=1 // pred_fallthru
      _
    %719 = vsyncpa [#allocation3], 1
    %720 = vsyncpa [#allocation6], 1
    %721 = vsyncpa [#allocation4], 1

</llo_original>
